<compile_context>
chip_gen: v7x
topology: tpu7x:2x2x1
jax: 0.10.0
libtpu: 0.0.40
codegen_flags: <defaults>
</compile_context>

<pallas_src>
import jax
import jax.numpy as jnp
from jax.experimental import pallas as pl
from jax.experimental.pallas import tpu as pltpu


def bottleneck_kernel(x_ref, w1_ref, w2_ref, w3_ref, b_ref, o_ref):
    # x_ref : (N, C, W)  compute dtype (bf16 or f32)
    # w1_ref: (P, C)    folded conv1*bn1 weights
    # w2_ref: (P, 3P)   folded conv2*bn2 weights, im2col layout [o, k*P + i]
    # w3_ref: (C, P)    folded conv3*bn3 weights
    # b_ref : (2P+C, 1) f32 packed biases [b1+1 | b2+1 | b3]
    # o_ref : (N, C, W) f32
    N = x_ref.shape[0]
    P = w1_ref.shape[0]
    C = w3_ref.shape[0]

    # Load weights / biases once, outside the (unrolled) batch loop.
    w1 = w1_ref[...]
    w2 = w2_ref[...]
    w3 = w3_ref[...]
    b_all = b_ref[...]                      # (2P + C, 1) f32
    b1 = b_all[0:P]                         # (P, 1)
    b2 = b_all[P:2 * P]                     # (P, 1)
    b3 = b_all[2 * P:]                      # (C, 1)

    cdt = x_ref.dtype

    for n in range(N):                      # N is small and static -> unrolled
        x = x_ref[n]                        # (C, W), compute dtype

        # ---- conv1 (1x1) + bn1 + 1 + relu  (scale folded into w1) ----------
        h1 = jnp.dot(w1, x, preferred_element_type=jnp.float32)      # (P, W)
        h1 = jnp.maximum(h1 + b1, 0.0)

        # ---- conv2 (1x3, pad (0,1), stride 1) + bn2 + 1 + relu -------------
        # Fused im2col: stack the three W-shifted taps along sublanes and do a
        # single (P, 3P) @ (3P, W) MXU matmul.
        zc = jnp.zeros((P, 1), dtype=jnp.float32)
        h_prev = jnp.concatenate([zc, h1[:, :-1]], axis=1)           # tap k=0
        h_next = jnp.concatenate([h1[:, 1:], zc], axis=1)            # tap k=2
        stacked = jnp.concatenate([h_prev, h1, h_next], axis=0)      # (3P, W)
        h2 = jnp.dot(w2, stacked.astype(cdt),
                     preferred_element_type=jnp.float32)             # (P, W)
        h2 = jnp.maximum(h2 + b2, 0.0)

        # ---- conv3 (1x1) + bn3 (scale folded into w3) -----------------------
        h3 = jnp.dot(w3, h2.astype(cdt),
                     preferred_element_type=jnp.float32)             # (C, W)
        h3 = h3 + b3

        # ---- residual add + relu --------------------------------------------
        o_ref[n] = jnp.maximum(h3 + x.astype(jnp.float32), 0.0)


def bottleneck_pallas(x_nchw, folded, *, compute_dtype=jnp.bfloat16):
    """x_nchw: (N, C, 1, W) float32.  Returns (N, C, 1, W) float32."""
    w1f, w2f, w3f, biases = folded
    N, C, H, W = x_nchw.shape
    assert H == 1, "genomic 1-D data: H must be 1"
    P = w1f.shape[0]
    assert C == 4 * P, "downsample=None requires inplanes == 4*planes"

    # Free squeeze (no transpose, no HBM round-trip); bf16 cast for HBM/MXU.
    x = x_nchw[:, :, 0, :].astype(compute_dtype)          # (N, C, W)
    w1c = w1f.astype(compute_dtype)
    w2c = w2f.astype(compute_dtype)
    w3c = w3f.astype(compute_dtype)

    out = pl.pallas_call(
        bottleneck_kernel,
        out_shape=jax.ShapeDtypeStruct((N, C, W), jnp.float32),
        grid=(1,),                                        # single invocation
        in_specs=[
            pl.BlockSpec((N, C, W),      lambda i: (0, 0, 0)),   # x
            pl.BlockSpec((P, C),         lambda i: (0, 0)),      # w1 folded
            pl.BlockSpec((P, 3 * P),     lambda i: (0, 0)),      # w2 folded (im2col)
            pl.BlockSpec((C, P),         lambda i: (0, 0)),      # w3 folded
            pl.BlockSpec((2 * P + C, 1), lambda i: (0, 0)),      # packed biases
        ],
        out_specs=pl.BlockSpec((N, C, W), lambda i: (0, 0, 0)),
        compiler_params=pltpu.CompilerParams(
            dimension_semantics=("arbitrary",)),
    )(x, w1c, w2c, w3c, biases)

    # Free reshape back to NCHW.
    return out[:, :, None, :]


def fold_params(raw):
    """Fold eval-mode BN scales into conv weights, '+1' into biases, and pack
    all biases into one operand."""
    (conv1, conv2, conv3, s1, b1, s2, b2, s3, b3) = raw
    P, C = conv1.shape[0], conv1.shape[1]
    w1f = s1[:, None] * conv1[:, :, 0, 0]                               # (P, C)
    # (o, i, k) -> (o, k, i) -> (P, 3P) so that w2f[o, k*P + i] = s2[o]*W2[o,i,k]
    w2f = (s2[:, None, None]
           * jnp.transpose(conv2[:, :, 0, :], (0, 2, 1))).reshape(P, 3 * P)
    w3f = s3[:, None] * conv3[:, :, 0, 0]                               # (C, P)
    biases = jnp.concatenate([b1 + 1.0, b2 + 1.0, b3]).reshape(2 * P + C, 1)
    return (w1f.astype(jnp.float32), w2f.astype(jnp.float32),
            w3f.astype(jnp.float32), biases.astype(jnp.float32))


def bottleneck_reference(x_nchw, raw):
    """Plain-JAX f32 reference of the PyTorch forward (eval-mode BN)."""
    (conv1, conv2, conv3, s1, b1, s2, b2, s3, b3) = raw
    N, C, H, W = x_nchw.shape
    x = x_nchw[:, :, 0, :]                                              # (N, C, W)
    h1 = jnp.einsum('pc,ncw->npw', conv1[:, :, 0, 0], x)
    h1 = jnp.maximum(h1 * s1[None, :, None] + b1[None, :, None] + 1.0, 0.0)
    h1p = jnp.pad(h1, ((0, 0), (0, 0), (1, 1)))
    h2 = sum(jnp.einsum('oi,niw->now', conv2[:, :, 0, k], h1p[:, :, k:k + W])
             for k in range(3))
    h2 = jnp.maximum(h2 * s2[None, :, None] + b2[None, :, None] + 1.0, 0.0)
    h3 = jnp.einsum('cp,npw->ncw', conv3[:, :, 0, 0], h2)
    h3 = h3 * s3[None, :, None] + b3[None, :, None]
    out = jnp.maximum(h3 + x, 0.0)
    return out[:, :, None, :]


def make_params(key, planes):
    """Deterministic synthetic parameters with PyTorch-native shapes.
    BN folded as scale = gamma/sqrt(var+eps), bias = beta - mean*scale."""
    C = 4 * planes
    eps = 1e-5
    keys = jax.random.split(key, 12)

    conv1 = jax.random.normal(keys[0], (planes, C, 1, 1), jnp.float32) * 0.1
    conv2 = jax.random.normal(keys[1], (planes, planes, 1, 3), jnp.float32) * 0.1
    conv3 = jax.random.normal(keys[2], (C, planes, 1, 1), jnp.float32) * 0.1

    def bn(kg, kb, km, kv, n):
        g = 1.0 + 0.1 * jax.random.normal(kg, (n,), jnp.float32)
        b = 0.1 * jax.random.normal(kb, (n,), jnp.float32)
        m = 0.1 * jax.random.normal(km, (n,), jnp.float32)
        v = jnp.abs(jax.random.normal(kv, (n,), jnp.float32)) + 0.5
        scale = g / jnp.sqrt(v + eps)
        bias = b - m * scale
        return scale, bias

    s1, b1 = bn(keys[3], keys[4], keys[5], keys[6], planes)
    s2, b2 = bn(keys[7], keys[8], keys[9], keys[10], planes)
    s3, b3 = bn(*jax.random.split(keys[11], 4), C)
    return (conv1, conv2, conv3, s1, b1, s2, b2, s3, b3)


if __name__ == "__main__":
    key = jax.random.PRNGKey(0)
    kx, kp = jax.random.split(key)

    planes = 4
    inplanes = 4 * planes        # 16, required since downsample=None
    N, H, W = 2, 1, 16

    x = jax.random.normal(kx, (N, inplanes, H, W), jnp.float32)
    raw = make_params(kp, planes)
    folded = fold_params(raw)

    ref = bottleneck_reference(x, raw)

    # f32 compute path: tight check of the kernel math / layout.
    out_f32 = jax.block_until_ready(
        bottleneck_pallas(x, folded, compute_dtype=jnp.float32))
    assert out_f32.shape == x.shape
    assert jnp.allclose(out_f32, ref, atol=1e-3, rtol=1e-3), "f32 mismatch"

    # bf16 production path: bf16 inputs/weights, f32 accumulation + epilogue
    # (tolerance accounts for bf16 rounding of activations and weights).
    out_bf16 = jax.block_until_ready(
        bottleneck_pallas(x, folded, compute_dtype=jnp.bfloat16))
    assert out_bf16.shape == x.shape
    assert jnp.allclose(out_bf16, ref, atol=5e-2, rtol=5e-2), "bf16 mismatch"

    print("KERNEL_OK")
</pallas_src>

<mosaic_0001>
module attributes {stable_mosaic.version = 11 : i64} {
  func.func @bottleneck_kernel(%arg0: i32, %arg1: memref<2x16x16xf32, #tpu.memory_space<vmem>>, %arg2: memref<4x16xf32, #tpu.memory_space<vmem>>, %arg3: memref<4x12xf32, #tpu.memory_space<vmem>>, %arg4: memref<16x4xf32, #tpu.memory_space<vmem>>, %arg5: memref<24x1xf32, #tpu.memory_space<vmem>>, %arg6: memref<2x16x16xf32, #tpu.memory_space<vmem>>) attributes {dimension_semantics = [#tpu.dimension_semantics<arbitrary>], iteration_bounds = array<i64: 1>, scalar_prefetch = 0 : i64, scratch_operands = 0 : i64, tpu.core_type = #tpu.core_type<tc>, window_params = [{pipeline_mode = #tpu.pipeline_mode<synchronous>, transform_indices = @transform_0, window_bounds = array<i64: 2, 16, 16>}, {pipeline_mode = #tpu.pipeline_mode<synchronous>, transform_indices = @transform_1, window_bounds = array<i64: 4, 16>}, {pipeline_mode = #tpu.pipeline_mode<synchronous>, transform_indices = @transform_2, window_bounds = array<i64: 4, 12>}, {pipeline_mode = #tpu.pipeline_mode<synchronous>, transform_indices = @transform_3, window_bounds = array<i64: 16, 4>}, {pipeline_mode = #tpu.pipeline_mode<synchronous>, transform_indices = @transform_4, window_bounds = array<i64: 24, 1>}, {pipeline_mode = #tpu.pipeline_mode<synchronous>, transform_indices = @transform_5, window_bounds = array<i64: 2, 16, 16>}]} {
    %c0 = arith.constant 0 : index
    %c0_0 = arith.constant 0 : index
    %0 = vector.load %arg2[%c0, %c0_0] : memref<4x16xf32, #tpu.memory_space<vmem>>, vector<4x16xf32>
    %c0_1 = arith.constant 0 : index
    %c0_2 = arith.constant 0 : index
    %1 = vector.load %arg3[%c0_1, %c0_2] : memref<4x12xf32, #tpu.memory_space<vmem>>, vector<4x12xf32>
    %c0_3 = arith.constant 0 : index
    %c0_4 = arith.constant 0 : index
    %2 = vector.load %arg4[%c0_3, %c0_4] : memref<16x4xf32, #tpu.memory_space<vmem>>, vector<16x4xf32>
    %c0_5 = arith.constant 0 : index
    %c0_6 = arith.constant 0 : index
    %3 = vector.load %arg5[%c0_5, %c0_6] : memref<24x1xf32, #tpu.memory_space<vmem>>, vector<24x1xf32>
    %4 = vector.extract_strided_slice %3 {offsets = [0, 0], sizes = [4, 1], strides = [1, 1]} : vector<24x1xf32> to vector<4x1xf32>
    %5 = vector.extract_strided_slice %3 {offsets = [4, 0], sizes = [4, 1], strides = [1, 1]} : vector<24x1xf32> to vector<4x1xf32>
    %6 = vector.extract_strided_slice %3 {offsets = [8, 0], sizes = [16, 1], strides = [1, 1]} : vector<24x1xf32> to vector<16x1xf32>
    %c0_7 = arith.constant 0 : index
    %c0_8 = arith.constant 0 : index
    %c0_9 = arith.constant 0 : index
    %7 = vector.load %arg1[%c0_7, %c0_8, %c0_9] : memref<2x16x16xf32, #tpu.memory_space<vmem>>, vector<1x16x16xf32>
    %8 = vector.shape_cast %7 : vector<1x16x16xf32> to vector<16x16xf32>
    %cst = arith.constant dense<0.000000e+00> : vector<4x16xf32>
    %9 = tpu.matmul %0, %8, %cst {dimension_numbers = #tpu.dot_dimension_numbers<[1], [0], [0], [1], [0, 0, 1, 1], [], []>} : vector<4x16xf32>, vector<16x16xf32>, vector<4x16xf32> -> vector<4x16xf32>
    %10 = vector.broadcast %4 : vector<4x1xf32> to vector<4x16xf32>
    %11 = arith.addf %9, %10 : vector<4x16xf32>
    %cst_10 = arith.constant 0.000000e+00 : f32
    %12 = vector.broadcast %cst_10 : f32 to vector<4x16xf32>
    %13 = arith.maximumf %11, %12 : vector<4x16xf32>
    %cst_11 = arith.constant 0.000000e+00 : f32
    %14 = vector.broadcast %cst_11 : f32 to vector<4x1xf32>
    %15 = vector.extract_strided_slice %13 {offsets = [0, 0], sizes = [4, 15], strides = [1, 1]} : vector<4x16xf32> to vector<4x15xf32>
    %16 = tpu.concatenate %14, %15 in 1 : vector<4x1xf32>, vector<4x15xf32> -> vector<4x16xf32>
    %17 = vector.extract_strided_slice %13 {offsets = [0, 1], sizes = [4, 15], strides = [1, 1]} : vector<4x16xf32> to vector<4x15xf32>
    %18 = tpu.concatenate %17, %14 in 1 : vector<4x15xf32>, vector<4x1xf32> -> vector<4x16xf32>
    %19 = tpu.concatenate %16, %13, %18 in 0 : vector<4x16xf32>, vector<4x16xf32>, vector<4x16xf32> -> vector<12x16xf32>
    %cst_12 = arith.constant dense<0.000000e+00> : vector<4x16xf32>
    %20 = tpu.matmul %1, %19, %cst_12 {dimension_numbers = #tpu.dot_dimension_numbers<[1], [0], [0], [1], [0, 0, 1, 1], [], []>} : vector<4x12xf32>, vector<12x16xf32>, vector<4x16xf32> -> vector<4x16xf32>
    %21 = vector.broadcast %5 : vector<4x1xf32> to vector<4x16xf32>
    %22 = arith.addf %20, %21 : vector<4x16xf32>
    %cst_13 = arith.constant 0.000000e+00 : f32
    %23 = vector.broadcast %cst_13 : f32 to vector<4x16xf32>
    %24 = arith.maximumf %22, %23 : vector<4x16xf32>
    %cst_14 = arith.constant dense<0.000000e+00> : vector<16x16xf32>
    %25 = tpu.matmul %2, %24, %cst_14 {dimension_numbers = #tpu.dot_dimension_numbers<[1], [0], [0], [1], [0, 0, 1, 1], [], []>} : vector<16x4xf32>, vector<4x16xf32>, vector<16x16xf32> -> vector<16x16xf32>
    %26 = vector.broadcast %6 : vector<16x1xf32> to vector<16x16xf32>
    %27 = arith.addf %25, %26 : vector<16x16xf32>
    %28 = arith.addf %27, %8 : vector<16x16xf32>
    %cst_15 = arith.constant 0.000000e+00 : f32
    %29 = vector.broadcast %cst_15 : f32 to vector<16x16xf32>
    %30 = arith.maximumf %28, %29 : vector<16x16xf32>
    %c0_16 = arith.constant 0 : index
    %c0_17 = arith.constant 0 : index
    %c0_18 = arith.constant 0 : index
    %31 = vector.load %arg6[%c0_16, %c0_17, %c0_18] : memref<2x16x16xf32, #tpu.memory_space<vmem>>, vector<1x16x16xf32>
    %32 = vector.shape_cast %31 : vector<1x16x16xf32> to vector<16x16xf32>
    %33 = vector.shape_cast %30 : vector<16x16xf32> to vector<1x16x16xf32>
    tpu.vector_store %arg6[%c0_16, %c0_17, %c0_18], %33 {strides = array<i32>} : memref<2x16x16xf32, #tpu.memory_space<vmem>>, vector<1x16x16xf32>,
    %c1 = arith.constant 1 : index
    %c0_19 = arith.constant 0 : index
    %c0_20 = arith.constant 0 : index
    %34 = vector.load %arg1[%c1, %c0_19, %c0_20] : memref<2x16x16xf32, #tpu.memory_space<vmem>>, vector<1x16x16xf32>
    %35 = vector.shape_cast %34 : vector<1x16x16xf32> to vector<16x16xf32>
    %cst_21 = arith.constant dense<0.000000e+00> : vector<4x16xf32>
    %36 = tpu.matmul %0, %35, %cst_21 {dimension_numbers = #tpu.dot_dimension_numbers<[1], [0], [0], [1], [0, 0, 1, 1], [], []>} : vector<4x16xf32>, vector<16x16xf32>, vector<4x16xf32> -> vector<4x16xf32>
    %37 = vector.broadcast %4 : vector<4x1xf32> to vector<4x16xf32>
    %38 = arith.addf %36, %37 : vector<4x16xf32>
    %cst_22 = arith.constant 0.000000e+00 : f32
    %39 = vector.broadcast %cst_22 : f32 to vector<4x16xf32>
    %40 = arith.maximumf %38, %39 : vector<4x16xf32>
    %cst_23 = arith.constant 0.000000e+00 : f32
    %41 = vector.broadcast %cst_23 : f32 to vector<4x1xf32>
    %42 = vector.extract_strided_slice %40 {offsets = [0, 0], sizes = [4, 15], strides = [1, 1]} : vector<4x16xf32> to vector<4x15xf32>
    %43 = tpu.concatenate %41, %42 in 1 : vector<4x1xf32>, vector<4x15xf32> -> vector<4x16xf32>
    %44 = vector.extract_strided_slice %40 {offsets = [0, 1], sizes = [4, 15], strides = [1, 1]} : vector<4x16xf32> to vector<4x15xf32>
    %45 = tpu.concatenate %44, %41 in 1 : vector<4x15xf32>, vector<4x1xf32> -> vector<4x16xf32>
    %46 = tpu.concatenate %43, %40, %45 in 0 : vector<4x16xf32>, vector<4x16xf32>, vector<4x16xf32> -> vector<12x16xf32>
    %cst_24 = arith.constant dense<0.000000e+00> : vector<4x16xf32>
    %47 = tpu.matmul %1, %46, %cst_24 {dimension_numbers = #tpu.dot_dimension_numbers<[1], [0], [0], [1], [0, 0, 1, 1], [], []>} : vector<4x12xf32>, vector<12x16xf32>, vector<4x16xf32> -> vector<4x16xf32>
    %48 = vector.broadcast %5 : vector<4x1xf32> to vector<4x16xf32>
    %49 = arith.addf %47, %48 : vector<4x16xf32>
    %cst_25 = arith.constant 0.000000e+00 : f32
    %50 = vector.broadcast %cst_25 : f32 to vector<4x16xf32>
    %51 = arith.maximumf %49, %50 : vector<4x16xf32>
    %cst_26 = arith.constant dense<0.000000e+00> : vector<16x16xf32>
    %52 = tpu.matmul %2, %51, %cst_26 {dimension_numbers = #tpu.dot_dimension_numbers<[1], [0], [0], [1], [0, 0, 1, 1], [], []>} : vector<16x4xf32>, vector<4x16xf32>, vector<16x16xf32> -> vector<16x16xf32>
    %53 = vector.broadcast %6 : vector<16x1xf32> to vector<16x16xf32>
    %54 = arith.addf %52, %53 : vector<16x16xf32>
    %55 = arith.addf %54, %35 : vector<16x16xf32>
    %cst_27 = arith.constant 0.000000e+00 : f32
    %56 = vector.broadcast %cst_27 : f32 to vector<16x16xf32>
    %57 = arith.maximumf %55, %56 : vector<16x16xf32>
    %c1_28 = arith.constant 1 : index
    %c0_29 = arith.constant 0 : index
    %c0_30 = arith.constant 0 : index
    %58 = vector.load %arg6[%c1_28, %c0_29, %c0_30] : memref<2x16x16xf32, #tpu.memory_space<vmem>>, vector<1x16x16xf32>
    %59 = vector.shape_cast %58 : vector<1x16x16xf32> to vector<16x16xf32>
    %60 = vector.shape_cast %57 : vector<16x16xf32> to vector<1x16x16xf32>
    tpu.vector_store %arg6[%c1_28, %c0_29, %c0_30], %60 {strides = array<i32>} : memref<2x16x16xf32, #tpu.memory_space<vmem>>, vector<1x16x16xf32>,
    return
  }
  func.func @transform_0(%arg0: i32) -> (i32, i32, i32) {
    %c0_i32 = arith.constant 0 : i32
    %c0_i32_0 = arith.constant 0 : i32
    %c0_i32_1 = arith.constant 0 : i32
    %c0_i32_2 = arith.constant 0 : i32
    return %c0_i32, %c0_i32_0, %c0_i32_1 : i32, i32, i32
  }
  func.func @transform_1(%arg0: i32) -> (i32, i32) {
    %c0_i32 = arith.constant 0 : i32
    %c0_i32_0 = arith.constant 0 : i32
    %c0_i32_1 = arith.constant 0 : i32
    return %c0_i32, %c0_i32_0 : i32, i32
  }
  func.func @transform_2(%arg0: i32) -> (i32, i32) {
    %c0_i32 = arith.constant 0 : i32
    %c0_i32_0 = arith.constant 0 : i32
    %c0_i32_1 = arith.constant 0 : i32
    return %c0_i32, %c0_i32_0 : i32, i32
  }
  func.func @transform_3(%arg0: i32) -> (i32, i32) {
    %c0_i32 = arith.constant 0 : i32
    %c0_i32_0 = arith.constant 0 : i32
    %c0_i32_1 = arith.constant 0 : i32
    return %c0_i32, %c0_i32_0 : i32, i32
  }
  func.func @transform_4(%arg0: i32) -> (i32, i32) {
    %c0_i32 = arith.constant 0 : i32
    %c0_i32_0 = arith.constant 0 : i32
    %c0_i32_1 = arith.constant 0 : i32
    return %c0_i32, %c0_i32_0 : i32, i32
  }
  func.func @transform_5(%arg0: i32) -> (i32, i32, i32) {
    %c0_i32 = arith.constant 0 : i32
    %c0_i32_0 = arith.constant 0 : i32
    %c0_i32_1 = arith.constant 0 : i32
    %c0_i32_2 = arith.constant 0 : i32
    return %c0_i32, %c0_i32_0, %c0_i32_1 : i32, i32, i32
  }
}

</mosaic_0001>

<llo_original>
// kernel: tpu_custom_call.1
$region0: #{tpu_custom_call.1}
  #allocation0 [shape = 'u32[]', space=smem, size = 0x4, offset = 0x4, fixed_abs, tag = 'smem constant byte address 0x4 - core index']
  #allocation1 [shape = 'u32[144,128]{1,0:T(1,128)}', space=vmem, size = 0x12000, scoped, tag = 'internal scratch']
  %s0 = inlined_call_operand.vmem [shape: f32[2,16,16], index: 0, kind: input, shape index: {}]
  %s1 = inlined_call_operand.vmem [shape: f32[4,16], index: 1, kind: input, shape index: {}]
  %s2 = inlined_call_operand.vmem [shape: f32[4,12], index: 2, kind: input, shape index: {}]
  %s3 = inlined_call_operand.vmem [shape: f32[16,4], index: 3, kind: input, shape index: {}]
  %s4 = inlined_call_operand.vmem [shape: f32[24,1], index: 4, kind: input, shape index: {}]
  %s5 = inlined_call_operand.hbm [shape: f32[2,16,16], index: 5, kind: output, shape index: {}]
  %s6 = sld [smem:[#allocation0]]
  $region30: #{tpu_custom_call.1} parent=0
    _
  %s8 = ssub.s32 1, %s6
  %s9 = scalar_select 0, %s8, %s6
  $region1: #{tpu_custom_call.1} parent=0
    #allocation2 [shape = 'u8[16384]{0}', space=vmem, size = 0x4000, scoped, tag = 'output window, operand 0, single buffered']
    #allocation3 [shape = 's32[1]{0}', space=sflag, size = 0x4, scoped, tag = 'scoped memory for tpu_custom_call.1']
    %10 = vsyncpa [#allocation3], 0
    // Predicated region
    $region2: #{tpu_custom_call.1} parent=1 // pred_check
      _
    $region3: #{tpu_custom_call.1} parent=1 // pred_check_branch
      %12 = sbr.rel (0) target = $region5
    $region4: #{tpu_custom_call.1} parent=1 // pred_region
      _
    $region5: #{tpu_custom_call.1} parent=1 // pred_fallthru
      _
    // Predicated region
    $region6: #{tpu_custom_call.1} parent=1 // pred_check
      _
    $region7: #{tpu_custom_call.1} parent=1 // pred_check_branch
      %14 = sbr.rel (0) target = $region9
    $region8: #{tpu_custom_call.1} parent=1 // pred_region
      _
    $region9: #{tpu_custom_call.1} parent=1 // pred_fallthru
      _
    // Predicated region
    $region10: #{tpu_custom_call.1} parent=1 // pred_check
      _
    $region11: #{tpu_custom_call.1} parent=1 // pred_check_branch
      %16 = sbr.rel (0) target = $region13
    $region12: #{tpu_custom_call.1} parent=1 // pred_region
      _
    $region13: #{tpu_custom_call.1} parent=1 // pred_fallthru
      _
    // Predicated region
    $region14: #{tpu_custom_call.1} parent=1 // pred_check
      _
    $region15: #{tpu_custom_call.1} parent=1 // pred_check_branch
      %18 = sbr.rel (0) target = $region17
    $region16: #{tpu_custom_call.1} parent=1 // pred_region
      _
    $region17: #{tpu_custom_call.1} parent=1 // pred_fallthru
      _
    // Predicated region
    $region18: #{tpu_custom_call.1} parent=1 // pred_check
      _
    $region19: #{tpu_custom_call.1} parent=1 // pred_check_branch
      %20 = sbr.rel (0) target = $region21
    $region20: #{tpu_custom_call.1} parent=1 // pred_region
      _
    $region21: #{tpu_custom_call.1} parent=1 // pred_fallthru
      _
    %v21 = vld [vmem:[%s1] sm:$0xf]
    %v22 = vld [vmem:[%s2] sm:$0xf]
    %v23 = vld [vmem:[%s3] sm:$0xff]
    %v24 = vld [vmem:[%s3 + $0x8] sm:$0xff]
    %v25 = vld [vmem:[%s4] sm:$0xff]
    %v26 = vld [vmem:[%s4 + $0x8] sm:$0xff]
    %v27 = vld [vmem:[%s4 + $0x10] sm:$0xff]
    %v28 = vld [vmem:[%s0] sm:$0xff]
    %v29 = vld [vmem:[%s0 + $0x8] sm:$0xff]
    %31 = vset.pattern.permute.xlu0 0
    %32 = vperm.xlu0 %31, %v25
    %v33 = vpop.permute.xlu0 %32
    %vm35 = vcmask 130048
    %v37 = vsel %vm35, %v21, 0
    %39 = vmatprep.subr.mxu0 0.0
    %40 = vmatpush1.msra.mxu0 %v28
    %41 = vmatprep.subr.mxu0 0.0
    %42 = vmatpush1.msra.mxu0 %v29
    %43 = vmatprep.subr.mxu0 0.0
    %44 = vmatpush1.msra.mxu0 0.0
    %45 = vmatprep.subr.mxu0 0.0
    %46 = vmatpush1.msra.mxu0 0.0
    %47 = vmatprep.subr.mxu0 0.0
    %48 = vmatpush1.msra.mxu0 0.0
    %49 = vmatprep.subr.mxu0 0.0
    %50 = vmatpush1.msra.mxu0 0.0
    %51 = vmatprep.subr.mxu0 0.0
    %52 = vmatpush1.msra.mxu0 0.0
    %53 = vmatprep.subr.mxu0 0.0
    %54 = vmatpush1.msra.mxu0 0.0
    %55 = vmatprep.subr.mxu0 0.0
    %56 = vmatpush1.msra.mxu0 0.0
    %57 = vmatprep.subr.mxu0 0.0
    %58 = vmatpush1.msra.mxu0 0.0
    %59 = vmatprep.subr.mxu0 0.0
    %60 = vmatpush1.msra.mxu0 0.0
    %61 = vmatprep.subr.mxu0 0.0
    %62 = vmatpush1.msra.mxu0 0.0
    %63 = vmatprep.subr.mxu0 0.0
    %64 = vmatpush1.msra.mxu0 0.0
    %65 = vmatprep.subr.mxu0 0.0
    %66 = vmatpush1.msra.mxu0 0.0
    %67 = vmatprep.subr.mxu0 0.0
    %68 = vmatpush1.msra.mxu0 0.0
    %69 = vmatprep.subr.mxu0 0.0
    %70 = vmatpush1.msra.mxu0 0.0
    %71 = vmatprep.subr.mxu0 0.0
    %72 = vmatpush1.msra.mxu0 0.0
    %73 = vmatprep.subr.mxu0 0.0
    %74 = vmatpush1.msra.mxu0 0.0
    %75 = vmatprep.subr.mxu0 0.0
    %76 = vmatpush1.msra.mxu0 0.0
    %77 = vmatprep.subr.mxu0 0.0
    %78 = vmatpush1.msra.mxu0 0.0
    %79 = vmatprep.subr.mxu0 0.0
    %80 = vmatpush1.msra.mxu0 0.0
    %81 = vmatprep.subr.mxu0 0.0
    %82 = vmatpush1.msra.mxu0 0.0
    %83 = vmatprep.subr.mxu0 0.0
    %84 = vmatpush1.msra.mxu0 0.0
    %85 = vmatprep.subr.mxu0 0.0
    %86 = vmatpush1.msra.mxu0 0.0
    %87 = vmatprep.subr.mxu0 0.0
    %88 = vmatpush1.msra.mxu0 0.0
    %89 = vmatprep.subr.mxu0 0.0
    %90 = vmatpush1.msra.mxu0 0.0
    %91 = vmatprep.subr.mxu0 0.0
    %92 = vmatpush1.msra.mxu0 0.0
    %93 = vmatprep.subr.mxu0 0.0
    %94 = vmatpush1.msra.mxu0 0.0
    %95 = vmatprep.subr.mxu0 0.0
    %96 = vmatpush1.msra.mxu0 0.0
    %97 = vmatprep.subr.mxu0 0.0
    %98 = vmatpush1.msra.mxu0 0.0
    %99 = vmatprep.subr.mxu0 0.0
    %100 = vmatpush1.msra.mxu0 0.0
    %101 = vmatprep.subr.mxu0 0.0
    %102 = vmatpush1.msra.mxu0 0.0
    %103 = vmatprep.mubr.f32.mxu0 0.0
    %104 = vmatmul.mubr.f32.gmra.mrb[0].mxu0 %v37
    %v105 = vpop.f32.mrb[0].mxu0
    %v106 = vadd.f32 %v33, %v105
    %v107 = vpop.f32.mrb[0].mxu0
    %108 = vdwg.mxu0
    %v109 = vmax.f32 %v106, 0.0
    %111 = vrot.lane.b32.xlu0 %v109, 1
    %v112 = vpop.permute.xlu0 %111
    %vm114 = vcmask 7168
    %v115 = vsel %vm114, 0.0, %v112
    %116 = vrot.lane.b32.xlu0 %v109, 127
    %v117 = vpop.permute.xlu0 %116
    %vm119 = vcmask 121856
    %v120 = vsel %vm119, %v117, 0.0
    %v121 = vrot.slane %v109, 4
    %vm123 = vcmask 1043456
    %v124 = vsel %vm123, %v115, %v121
    %v125 = vrot.slane %v33, 4
    %vm127 = vcmask 97280
    %v129 = vsel %vm127, %v22, 0
    %v132 = vsel %vm123, %v120, 0
    %134 = vmatprep.subr.mxu0 0.0
    %135 = vmatpush1.msra.mxu0 %v124
    %136 = vmatprep.subr.mxu0 0.0
    %137 = vmatpush1.msra.mxu0 %v132
    %138 = vmatprep.subr.mxu0 0.0
    %139 = vmatpush1.msra.mxu0 0.0
    %140 = vmatprep.subr.mxu0 0.0
    %141 = vmatpush1.msra.mxu0 0.0
    %142 = vmatprep.subr.mxu0 0.0
    %143 = vmatpush1.msra.mxu0 0.0
    %144 = vmatprep.subr.mxu0 0.0
    %145 = vmatpush1.msra.mxu0 0.0
    %146 = vmatprep.subr.mxu0 0.0
    %147 = vmatpush1.msra.mxu0 0.0
    %148 = vmatprep.subr.mxu0 0.0
    %149 = vmatpush1.msra.mxu0 0.0
    %150 = vmatprep.subr.mxu0 0.0
    %151 = vmatpush1.msra.mxu0 0.0
    %152 = vmatprep.subr.mxu0 0.0
    %153 = vmatpush1.msra.mxu0 0.0
    %154 = vmatprep.subr.mxu0 0.0
    %155 = vmatpush1.msra.mxu0 0.0
    %156 = vmatprep.subr.mxu0 0.0
    %157 = vmatpush1.msra.mxu0 0.0
    %158 = vmatprep.subr.mxu0 0.0
    %159 = vmatpush1.msra.mxu0 0.0
    %160 = vmatprep.subr.mxu0 0.0
    %161 = vmatpush1.msra.mxu0 0.0
    %162 = vmatprep.subr.mxu0 0.0
    %163 = vmatpush1.msra.mxu0 0.0
    %164 = vmatprep.subr.mxu0 0.0
    %165 = vmatpush1.msra.mxu0 0.0
    %166 = vmatprep.subr.mxu0 0.0
    %167 = vmatpush1.msra.mxu0 0.0
    %168 = vmatprep.subr.mxu0 0.0
    %169 = vmatpush1.msra.mxu0 0.0
    %170 = vmatprep.subr.mxu0 0.0
    %171 = vmatpush1.msra.mxu0 0.0
    %172 = vmatprep.subr.mxu0 0.0
    %173 = vmatpush1.msra.mxu0 0.0
    %174 = vmatprep.subr.mxu0 0.0
    %175 = vmatpush1.msra.mxu0 0.0
    %176 = vmatprep.subr.mxu0 0.0
    %177 = vmatpush1.msra.mxu0 0.0
    %178 = vmatprep.subr.mxu0 0.0
    %179 = vmatpush1.msra.mxu0 0.0
    %180 = vmatprep.subr.mxu0 0.0
    %181 = vmatpush1.msra.mxu0 0.0
    %182 = vmatprep.subr.mxu0 0.0
    %183 = vmatpush1.msra.mxu0 0.0
    %184 = vmatprep.subr.mxu0 0.0
    %185 = vmatpush1.msra.mxu0 0.0
    %186 = vmatprep.subr.mxu0 0.0
    %187 = vmatpush1.msra.mxu0 0.0
    %188 = vmatprep.subr.mxu0 0.0
    %189 = vmatpush1.msra.mxu0 0.0
    %190 = vmatprep.subr.mxu0 0.0
    %191 = vmatpush1.msra.mxu0 0.0
    %192 = vmatprep.subr.mxu0 0.0
    %193 = vmatpush1.msra.mxu0 0.0
    %194 = vmatprep.subr.mxu0 0.0
    %195 = vmatpush1.msra.mxu0 0.0
    %196 = vmatprep.subr.mxu0 0.0
    %197 = vmatpush1.msra.mxu0 0.0
    %198 = vmatprep.mubr.f32.mxu0 0.0
    %199 = vmatmul.mubr.f32.gmra.mrb[0].mxu0 %v129
    %v200 = vpop.f32.mrb[0].mxu0
    %v201 = vadd.f32 %v125, %v200
    %v202 = vpop.f32.mrb[0].mxu0
    %203 = vdwg.mxu0
    %v204 = vmax.f32 %v201, 0.0
    %206 = vset.pattern.permute.xlu0 0
    %207 = vperm.xlu0 %206, %v26
    %v208 = vpop.permute.xlu0 %207
    %211 = vset.pattern.permute.xlu0 0
    %212 = vperm.xlu0 %211, %v27
    %v213 = vpop.permute.xlu0 %212
    %vm215 = vcmask 31744
    %v217 = vsel %vm215, %v23, 0
    %v220 = vsel %vm215, %v24, 0
    %v223 = vsel %vm123, %v204, 0
    %225 = vmatprep.subr.mxu0 0.0
    %226 = vmatpush1.msra.mxu0 %v223
    %227 = vmatprep.subr.mxu0 0.0
    %228 = vmatpush1.msra.mxu0 0.0
    %229 = vmatprep.subr.mxu0 0.0
    %230 = vmatpush1.msra.mxu0 0.0
    %231 = vmatprep.subr.mxu0 0.0
    %232 = vmatpush1.msra.mxu0 0.0
    %233 = vmatprep.subr.mxu0 0.0
    %234 = vmatpush1.msra.mxu0 0.0
    %235 = vmatprep.subr.mxu0 0.0
    %236 = vmatpush1.msra.mxu0 0.0
    %237 = vmatprep.subr.mxu0 0.0
    %238 = vmatpush1.msra.mxu0 0.0
    %239 = vmatprep.subr.mxu0 0.0
    %240 = vmatpush1.msra.mxu0 0.0
    %241 = vmatprep.subr.mxu0 0.0
    %242 = vmatpush1.msra.mxu0 0.0
    %243 = vmatprep.subr.mxu0 0.0
    %244 = vmatpush1.msra.mxu0 0.0
    %245 = vmatprep.subr.mxu0 0.0
    %246 = vmatpush1.msra.mxu0 0.0
    %247 = vmatprep.subr.mxu0 0.0
    %248 = vmatpush1.msra.mxu0 0.0
    %249 = vmatprep.subr.mxu0 0.0
    %250 = vmatpush1.msra.mxu0 0.0
    %251 = vmatprep.subr.mxu0 0.0
    %252 = vmatpush1.msra.mxu0 0.0
    %253 = vmatprep.subr.mxu0 0.0
    %254 = vmatpush1.msra.mxu0 0.0
    %255 = vmatprep.subr.mxu0 0.0
    %256 = vmatpush1.msra.mxu0 0.0
    %257 = vmatprep.subr.mxu0 0.0
    %258 = vmatpush1.msra.mxu0 0.0
    %259 = vmatprep.subr.mxu0 0.0
    %260 = vmatpush1.msra.mxu0 0.0
    %261 = vmatprep.subr.mxu0 0.0
    %262 = vmatpush1.msra.mxu0 0.0
    %263 = vmatprep.subr.mxu0 0.0
    %264 = vmatpush1.msra.mxu0 0.0
    %265 = vmatprep.subr.mxu0 0.0
    %266 = vmatpush1.msra.mxu0 0.0
    %267 = vmatprep.subr.mxu0 0.0
    %268 = vmatpush1.msra.mxu0 0.0
    %269 = vmatprep.subr.mxu0 0.0
    %270 = vmatpush1.msra.mxu0 0.0
    %271 = vmatprep.subr.mxu0 0.0
    %272 = vmatpush1.msra.mxu0 0.0
    %273 = vmatprep.subr.mxu0 0.0
    %274 = vmatpush1.msra.mxu0 0.0
    %275 = vmatprep.subr.mxu0 0.0
    %276 = vmatpush1.msra.mxu0 0.0
    %277 = vmatprep.subr.mxu0 0.0
    %278 = vmatpush1.msra.mxu0 0.0
    %279 = vmatprep.subr.mxu0 0.0
    %280 = vmatpush1.msra.mxu0 0.0
    %281 = vmatprep.subr.mxu0 0.0
    %282 = vmatpush1.msra.mxu0 0.0
    %283 = vmatprep.subr.mxu0 0.0
    %284 = vmatpush1.msra.mxu0 0.0
    %285 = vmatprep.subr.mxu0 0.0
    %286 = vmatpush1.msra.mxu0 0.0
    %287 = vmatprep.subr.mxu0 0.0
    %288 = vmatpush1.msra.mxu0 0.0
    %289 = vmatprep.mubr.f32.mxu0 0.0
    %290 = vmatmul.mubr.f32.gmra.mrb[0].mxu0 %v217
    %v291 = vpop.f32.mrb[0].mxu0
    %v292 = vadd.f32 %v208, %v291
    %v293 = vpop.f32.mrb[0].mxu0
    %294 = vmatprep.mubr.f32.mxu0 0.0
    %295 = vmatmul.mubr.f32.gmra.mrb[0].mxu0 %v220
    %v296 = vpop.f32.mrb[0].mxu0
    %v297 = vadd.f32 %v213, %v296
    %v298 = vpop.f32.mrb[0].mxu0
    %299 = vdwg.mxu0
    %v300 = vadd.f32 %v292, %v28
    %v301 = vadd.f32 %v297, %v29
    %v302 = vmax.f32 %v300, 0.0
    %v303 = vmax.f32 %v301, 0.0
    %304 = vst.msk [vmem:[#allocation2] sm:$0xff] %vm35, %v302
    %305 = vst.msk [vmem:[#allocation2 + $0x8] sm:$0xff] %vm35, %v303
    %s306 = scalar_lea.vmem %s0, 16
    %v307 = vld [vmem:[%s306] sm:$0xff]
    %v308 = vld [vmem:[%s306 + $0x8] sm:$0xff]
    %309 = vmatprep.subr.mxu0 0.0
    %310 = vmatpush1.msra.mxu0 %v307
    %311 = vmatprep.subr.mxu0 0.0
    %312 = vmatpush1.msra.mxu0 %v308
    %313 = vmatprep.subr.mxu0 0.0
    %314 = vmatpush1.msra.mxu0 0.0
    %315 = vmatprep.subr.mxu0 0.0
    %316 = vmatpush1.msra.mxu0 0.0
    %317 = vmatprep.subr.mxu0 0.0
    %318 = vmatpush1.msra.mxu0 0.0
    %319 = vmatprep.subr.mxu0 0.0
    %320 = vmatpush1.msra.mxu0 0.0
    %321 = vmatprep.subr.mxu0 0.0
    %322 = vmatpush1.msra.mxu0 0.0
    %323 = vmatprep.subr.mxu0 0.0
    %324 = vmatpush1.msra.mxu0 0.0
    %325 = vmatprep.subr.mxu0 0.0
    %326 = vmatpush1.msra.mxu0 0.0
    %327 = vmatprep.subr.mxu0 0.0
    %328 = vmatpush1.msra.mxu0 0.0
    %329 = vmatprep.subr.mxu0 0.0
    %330 = vmatpush1.msra.mxu0 0.0
    %331 = vmatprep.subr.mxu0 0.0
    %332 = vmatpush1.msra.mxu0 0.0
    %333 = vmatprep.subr.mxu0 0.0
    %334 = vmatpush1.msra.mxu0 0.0
    %335 = vmatprep.subr.mxu0 0.0
    %336 = vmatpush1.msra.mxu0 0.0
    %337 = vmatprep.subr.mxu0 0.0
    %338 = vmatpush1.msra.mxu0 0.0
    %339 = vmatprep.subr.mxu0 0.0
    %340 = vmatpush1.msra.mxu0 0.0
    %341 = vmatprep.subr.mxu0 0.0
    %342 = vmatpush1.msra.mxu0 0.0
    %343 = vmatprep.subr.mxu0 0.0
    %344 = vmatpush1.msra.mxu0 0.0
    %345 = vmatprep.subr.mxu0 0.0
    %346 = vmatpush1.msra.mxu0 0.0
    %347 = vmatprep.subr.mxu0 0.0
    %348 = vmatpush1.msra.mxu0 0.0
    %349 = vmatprep.subr.mxu0 0.0
    %350 = vmatpush1.msra.mxu0 0.0
    %351 = vmatprep.subr.mxu0 0.0
    %352 = vmatpush1.msra.mxu0 0.0
    %353 = vmatprep.subr.mxu0 0.0
    %354 = vmatpush1.msra.mxu0 0.0
    %355 = vmatprep.subr.mxu0 0.0
    %356 = vmatpush1.msra.mxu0 0.0
    %357 = vmatprep.subr.mxu0 0.0
    %358 = vmatpush1.msra.mxu0 0.0
    %359 = vmatprep.subr.mxu0 0.0
    %360 = vmatpush1.msra.mxu0 0.0
    %361 = vmatprep.subr.mxu0 0.0
    %362 = vmatpush1.msra.mxu0 0.0
    %363 = vmatprep.subr.mxu0 0.0
    %364 = vmatpush1.msra.mxu0 0.0
    %365 = vmatprep.subr.mxu0 0.0
    %366 = vmatpush1.msra.mxu0 0.0
    %367 = vmatprep.subr.mxu0 0.0
    %368 = vmatpush1.msra.mxu0 0.0
    %369 = vmatprep.subr.mxu0 0.0
    %370 = vmatpush1.msra.mxu0 0.0
    %371 = vmatprep.subr.mxu0 0.0
    %372 = vmatpush1.msra.mxu0 0.0
    %373 = vmatprep.mubr.f32.mxu0 0.0
    %374 = vmatmul.mubr.f32.gmra.mrb[0].mxu0 %v37
    %v375 = vpop.f32.mrb[0].mxu0
    %v376 = vadd.f32 %v33, %v375
    %v377 = vpop.f32.mrb[0].mxu0
    %378 = vdwg.mxu0
    %v379 = vmax.f32 %v376, 0.0
    %381 = vrot.lane.b32.xlu0 %v379, 1
    %v382 = vpop.permute.xlu0 %381
    %v384 = vsel %vm114, 0.0, %v382
    %385 = vrot.lane.b32.xlu0 %v379, 127
    %v386 = vpop.permute.xlu0 %385
    %v388 = vsel %vm119, %v386, 0.0
    %v389 = vrot.slane %v379, 4
    %v391 = vsel %vm123, %v384, %v389
    %v393 = vsel %vm123, %v388, 0
    %395 = vmatprep.subr.mxu0 0.0
    %396 = vmatpush1.msra.mxu0 %v391
    %397 = vmatprep.subr.mxu0 0.0
    %398 = vmatpush1.msra.mxu0 %v393
    %399 = vmatprep.subr.mxu0 0.0
    %400 = vmatpush1.msra.mxu0 0.0
    %401 = vmatprep.subr.mxu0 0.0
    %402 = vmatpush1.msra.mxu0 0.0
    %403 = vmatprep.subr.mxu0 0.0
    %404 = vmatpush1.msra.mxu0 0.0
    %405 = vmatprep.subr.mxu0 0.0
    %406 = vmatpush1.msra.mxu0 0.0
    %407 = vmatprep.subr.mxu0 0.0
    %408 = vmatpush1.msra.mxu0 0.0
    %409 = vmatprep.subr.mxu0 0.0
    %410 = vmatpush1.msra.mxu0 0.0
    %411 = vmatprep.subr.mxu0 0.0
    %412 = vmatpush1.msra.mxu0 0.0
    %413 = vmatprep.subr.mxu0 0.0
    %414 = vmatpush1.msra.mxu0 0.0
    %415 = vmatprep.subr.mxu0 0.0
    %416 = vmatpush1.msra.mxu0 0.0
    %417 = vmatprep.subr.mxu0 0.0
    %418 = vmatpush1.msra.mxu0 0.0
    %419 = vmatprep.subr.mxu0 0.0
    %420 = vmatpush1.msra.mxu0 0.0
    %421 = vmatprep.subr.mxu0 0.0
    %422 = vmatpush1.msra.mxu0 0.0
    %423 = vmatprep.subr.mxu0 0.0
    %424 = vmatpush1.msra.mxu0 0.0
    %425 = vmatprep.subr.mxu0 0.0
    %426 = vmatpush1.msra.mxu0 0.0
    %427 = vmatprep.subr.mxu0 0.0
    %428 = vmatpush1.msra.mxu0 0.0
    %429 = vmatprep.subr.mxu0 0.0
    %430 = vmatpush1.msra.mxu0 0.0
    %431 = vmatprep.subr.mxu0 0.0
    %432 = vmatpush1.msra.mxu0 0.0
    %433 = vmatprep.subr.mxu0 0.0
    %434 = vmatpush1.msra.mxu0 0.0
    %435 = vmatprep.subr.mxu0 0.0
    %436 = vmatpush1.msra.mxu0 0.0
    %437 = vmatprep.subr.mxu0 0.0
    %438 = vmatpush1.msra.mxu0 0.0
    %439 = vmatprep.subr.mxu0 0.0
    %440 = vmatpush1.msra.mxu0 0.0
    %441 = vmatprep.subr.mxu0 0.0
    %442 = vmatpush1.msra.mxu0 0.0
    %443 = vmatprep.subr.mxu0 0.0
    %444 = vmatpush1.msra.mxu0 0.0
    %445 = vmatprep.subr.mxu0 0.0
    %446 = vmatpush1.msra.mxu0 0.0
    %447 = vmatprep.subr.mxu0 0.0
    %448 = vmatpush1.msra.mxu0 0.0
    %449 = vmatprep.subr.mxu0 0.0
    %450 = vmatpush1.msra.mxu0 0.0
    %451 = vmatprep.subr.mxu0 0.0
    %452 = vmatpush1.msra.mxu0 0.0
    %453 = vmatprep.subr.mxu0 0.0
    %454 = vmatpush1.msra.mxu0 0.0
    %455 = vmatprep.subr.mxu0 0.0
    %456 = vmatpush1.msra.mxu0 0.0
    %457 = vmatprep.subr.mxu0 0.0
    %458 = vmatpush1.msra.mxu0 0.0
    %459 = vmatprep.mubr.f32.mxu0 0.0
    %460 = vmatmul.mubr.f32.gmra.mrb[0].mxu0 %v129
    %v461 = vpop.f32.mrb[0].mxu0
    %v462 = vadd.f32 %v125, %v461
    %v463 = vpop.f32.mrb[0].mxu0
    %464 = vdwg.mxu0
    %v465 = vmax.f32 %v462, 0.0
    %v467 = vsel %vm123, %v465, 0
    %469 = vmatprep.subr.mxu0 0.0
    %470 = vmatpush1.msra.mxu0 %v467
    %471 = vmatprep.subr.mxu0 0.0
    %472 = vmatpush1.msra.mxu0 0.0
    %473 = vmatprep.subr.mxu0 0.0
    %474 = vmatpush1.msra.mxu0 0.0
    %475 = vmatprep.subr.mxu0 0.0
    %476 = vmatpush1.msra.mxu0 0.0
    %477 = vmatprep.subr.mxu0 0.0
    %478 = vmatpush1.msra.mxu0 0.0
    %479 = vmatprep.subr.mxu0 0.0
    %480 = vmatpush1.msra.mxu0 0.0
    %481 = vmatprep.subr.mxu0 0.0
    %482 = vmatpush1.msra.mxu0 0.0
    %483 = vmatprep.subr.mxu0 0.0
    %484 = vmatpush1.msra.mxu0 0.0
    %485 = vmatprep.subr.mxu0 0.0
    %486 = vmatpush1.msra.mxu0 0.0
    %487 = vmatprep.subr.mxu0 0.0
    %488 = vmatpush1.msra.mxu0 0.0
    %489 = vmatprep.subr.mxu0 0.0
    %490 = vmatpush1.msra.mxu0 0.0
    %491 = vmatprep.subr.mxu0 0.0
    %492 = vmatpush1.msra.mxu0 0.0
    %493 = vmatprep.subr.mxu0 0.0
    %494 = vmatpush1.msra.mxu0 0.0
    %495 = vmatprep.subr.mxu0 0.0
    %496 = vmatpush1.msra.mxu0 0.0
    %497 = vmatprep.subr.mxu0 0.0
    %498 = vmatpush1.msra.mxu0 0.0
    %499 = vmatprep.subr.mxu0 0.0
    %500 = vmatpush1.msra.mxu0 0.0
    %501 = vmatprep.subr.mxu0 0.0
    %502 = vmatpush1.msra.mxu0 0.0
    %503 = vmatprep.subr.mxu0 0.0
    %504 = vmatpush1.msra.mxu0 0.0
    %505 = vmatprep.subr.mxu0 0.0
    %506 = vmatpush1.msra.mxu0 0.0
    %507 = vmatprep.subr.mxu0 0.0
    %508 = vmatpush1.msra.mxu0 0.0
    %509 = vmatprep.subr.mxu0 0.0
    %510 = vmatpush1.msra.mxu0 0.0
    %511 = vmatprep.subr.mxu0 0.0
    %512 = vmatpush1.msra.mxu0 0.0
    %513 = vmatprep.subr.mxu0 0.0
    %514 = vmatpush1.msra.mxu0 0.0
    %515 = vmatprep.subr.mxu0 0.0
    %516 = vmatpush1.msra.mxu0 0.0
    %517 = vmatprep.subr.mxu0 0.0
    %518 = vmatpush1.msra.mxu0 0.0
    %519 = vmatprep.subr.mxu0 0.0
    %520 = vmatpush1.msra.mxu0 0.0
    %521 = vmatprep.subr.mxu0 0.0
    %522 = vmatpush1.msra.mxu0 0.0
    %523 = vmatprep.subr.mxu0 0.0
    %524 = vmatpush1.msra.mxu0 0.0
    %525 = vmatprep.subr.mxu0 0.0
    %526 = vmatpush1.msra.mxu0 0.0
    %527 = vmatprep.subr.mxu0 0.0
    %528 = vmatpush1.msra.mxu0 0.0
    %529 = vmatprep.subr.mxu0 0.0
    %530 = vmatpush1.msra.mxu0 0.0
    %531 = vmatprep.subr.mxu0 0.0
    %532 = vmatpush1.msra.mxu0 0.0
    %533 = vmatprep.mubr.f32.mxu0 0.0
    %534 = vmatmul.mubr.f32.gmra.mrb[0].mxu0 %v217
    %v535 = vpop.f32.mrb[0].mxu0
    %v536 = vadd.f32 %v208, %v535
    %v537 = vpop.f32.mrb[0].mxu0
    %538 = vmatprep.mubr.f32.mxu0 0.0
    %539 = vmatmul.mubr.f32.gmra.mrb[0].mxu0 %v220
    %v540 = vpop.f32.mrb[0].mxu0
    %v541 = vadd.f32 %v213, %v540
    %v542 = vpop.f32.mrb[0].mxu0
    %543 = vdwg.mxu0
    %v544 = vadd.f32 %v536, %v307
    %v545 = vadd.f32 %v541, %v308
    %v546 = vmax.f32 %v544, 0.0
    %v547 = vmax.f32 %v545, 0.0
    %s548 = scalar_lea.vmem [#allocation2], 16
    %549 = vst.msk [vmem:[%s548] sm:$0xff] %vm35, %v546
    %550 = vst.msk [vmem:[%s548 + $0x8] sm:$0xff] %vm35, %v547
    // Predicated region
    $region22: #{tpu_custom_call.1} parent=1 // pred_check
      _
    $region23: #{tpu_custom_call.1} parent=1 // pred_check_branch
      %552 = sbr.rel (0) target = $region25
    $region24: #{tpu_custom_call.1} parent=1 // pred_region
      %s554 = ssub.s32 512, 512
      %555 = vsyncadd [#allocation3], %s554
      %s556 = sshll.u32 [#allocation2], 4
      %s557 = int_to_ptr.vmem [resolvable:$true] %s556
      %562 = dma.vmem_to_hbm [thread:$0]  %s557, 512, %s5, [#allocation3], 128, 128, 8
    $region25: #{tpu_custom_call.1} parent=1 // pred_fallthru
      _
    // Predicated region
    $region26: #{tpu_custom_call.1} parent=1 // pred_check
      _
    $region27: #{tpu_custom_call.1} parent=1 // pred_check_branch
      %564 = sbr.rel (0) target = $region29
    $region28: #{tpu_custom_call.1} parent=1 // pred_region
      %565 = dma.done [#allocation3], 512
    $region29: #{tpu_custom_call.1} parent=1 // pred_fallthru
      _
    %566 = vsyncpa [#allocation3], 1

</llo_original>
